<compile_context>
chip_gen: v5e
topology: v5e:2x2
jax: 0.10.0
libtpu: 0.0.40
codegen_flags: <defaults>
</compile_context>

<pallas_src>
import jax
import jax.numpy as jnp
from jax import lax
from jax.experimental import pallas as pl
from jax.experimental.pallas import tpu as pltpu


def _linear_fullk_kernel(x_ref, w_ref, o_ref):
    # x: (tm, K), w: (tn, K)  ->  o = x @ w.T : (tm, tn), f32 MXU accumulation.
    o_ref[...] = lax.dot_general(
        x_ref[...],
        w_ref[...],
        dimension_numbers=(((1,), (1,)), ((), ())),
        preferred_element_type=jnp.float32,
    ).astype(o_ref.dtype)


def _linear_ktiled_kernel(x_ref, w_ref, o_ref, acc_ref):
    # Streaming-K fallback: accumulate x @ w.T into an f32 scratch across the
    # last ("arbitrary") grid axis.
    @pl.when(pl.program_id(2) == 0)
    def _():
        acc_ref[...] = jnp.zeros_like(acc_ref)

    acc_ref[...] += lax.dot_general(
        x_ref[...],
        w_ref[...],
        dimension_numbers=(((1,), (1,)), ((), ())),
        preferred_element_type=jnp.float32,
    )

    @pl.when(pl.program_id(2) == pl.num_programs(2) - 1)
    def _():
        o_ref[...] = acc_ref[...].astype(o_ref.dtype)


def _linear_2d(x: jax.Array, w: jax.Array, *, tm=None, tn=None, tk=None):
    """y = x @ w.T for 2-D x, with w in nn.Linear layout (out_features, in_features)."""
    M, K = x.shape
    N, Kw = w.shape
    assert K == Kw, f"in_features mismatch: x has {K}, w has {Kw}"

    itemsize = jnp.dtype(x.dtype).itemsize

    # Tile selection: full dims when small (always layout-legal), otherwise
    # MXU/vreg-aligned tiles (tm multiple of 8, tn multiple of 128).
    if tm is None:
        tm = M if M <= 256 else 256
    if tn is None:
        tn = N if N <= 512 else 512

    cost = pl.CostEstimate(
        flops=2 * M * N * K,
        transcendentals=0,
        bytes_accessed=itemsize * (M * K + N * K + M * N),
    )

    # Double-buffered VMEM footprint of one full-K grid step.
    fullk_step_bytes = 2 * (tm * K + tn * K + tm * tn) * itemsize
    use_fullk = tk is None and fullk_step_bytes <= (12 << 20)  # fits v5e's 16 MiB scoped VMEM

    if use_fullk:
        # No reduction grid axis: K is resident in VMEM, the weight tile is
        # DMA'd once per (i, j) block and the output is written directly.
        grid = (pl.cdiv(M, tm), pl.cdiv(N, tn))
        return pl.pallas_call(
            _linear_fullk_kernel,
            out_shape=jax.ShapeDtypeStruct((M, N), x.dtype),
            grid_spec=pltpu.PrefetchScalarGridSpec(
                num_scalar_prefetch=0,
                grid=grid,
                in_specs=[
                    pl.BlockSpec((tm, K), lambda i, j: (i, 0)),
                    pl.BlockSpec((tn, K), lambda i, j: (j, 0)),
                ],
                out_specs=pl.BlockSpec((tm, tn), lambda i, j: (i, j)),
            ),
            compiler_params=pltpu.CompilerParams(
                dimension_semantics=("parallel", "parallel"),
            ),
            cost_estimate=cost,
        )(x, w)

    # Streaming-K fallback (very large K, or an explicitly requested tk).
    if tk is None:
        tk = 512
    if K % tk != 0:
        pad = tk - (K % tk)
        # Zero padding along K does not change x @ w.T.
        x = jnp.pad(x, ((0, 0), (0, pad)))
        w = jnp.pad(w, ((0, 0), (0, pad)))
        K = K + pad

    grid = (pl.cdiv(M, tm), pl.cdiv(N, tn), K // tk)
    return pl.pallas_call(
        _linear_ktiled_kernel,
        out_shape=jax.ShapeDtypeStruct((M, N), x.dtype),
        grid_spec=pltpu.PrefetchScalarGridSpec(
            num_scalar_prefetch=0,
            grid=grid,
            in_specs=[
                pl.BlockSpec((tm, tk), lambda i, j, k: (i, k)),
                pl.BlockSpec((tn, tk), lambda i, j, k: (j, k)),
            ],
            out_specs=pl.BlockSpec((tm, tn), lambda i, j, k: (i, j)),
            scratch_shapes=[pltpu.VMEM((tm, tn), jnp.float32)],
        ),
        compiler_params=pltpu.CompilerParams(
            dimension_semantics=("parallel", "parallel", "arbitrary"),
        ),
        cost_estimate=cost,
    )(x, w)


def linear_no_bias(x: jax.Array, w: jax.Array, *, tm=None, tn=None, tk=None):
    """y = x @ w.T supporting arbitrary leading batch dims (like F.linear)."""
    lead = x.shape[:-1]
    K = x.shape[-1]
    y2d = _linear_2d(x.reshape(-1, K), w, tm=tm, tn=tn, tk=tk)
    return y2d.reshape(*lead, w.shape[0])


class LinearModel:
    """JAX/Pallas port of the PyTorch LinearModel: y = x @ w.T (no bias)."""

    def __init__(self, weight: jax.Array | None = None):
        if weight is None:
            # Matches the PyTorch default: torch.ones((256, 256), float32).
            weight = jnp.ones((256, 256), dtype=jnp.float32)
        self.w = weight

    def __call__(self, x: jax.Array) -> jax.Array:
        return linear_no_bias(x, self.w)


if __name__ == "__main__":
    key = jax.random.PRNGKey(0)
    M, K, N = 8, 256, 256  # small batch, in_features fixed by the default 256x256 weight
    x = jax.random.normal(key, (M, K), dtype=jnp.float32)

    # 1) Default model (ones weight), full-K fast path (single grid step).
    model = LinearModel()
    out = jax.block_until_ready(model(x))
    ref = x @ model.w.T
    assert out.shape == (M, N) and out.dtype == jnp.float32
    assert jnp.allclose(out, ref, atol=1e-3, rtol=1e-3)

    # 2) Non-symmetric random weight: validates the x @ w.T (nn.Linear) semantics.
    w = jax.random.normal(jax.random.PRNGKey(1), (N, K), dtype=jnp.float32)
    out2 = jax.block_until_ready(linear_no_bias(x, w))
    ref2 = x @ w.T
    assert jnp.allclose(out2, ref2, atol=0.5, rtol=2e-2)  # tolerant of MXU precision mode

    # 3) Exercise the streaming-K fallback path and cross-check against the fast path.
    out3 = jax.block_until_ready(linear_no_bias(x, w, tk=128))
    assert jnp.allclose(out3, out2, atol=1e-3, rtol=1e-3)

    print("KERNEL_OK")
</pallas_src>

<mosaic_0001>
module attributes {stable_mosaic.version = 11 : i64} {
  func.func @_linear_fullk_kernel(%arg0: i32, %arg1: i32, %arg2: memref<8x256xf32, #tpu.memory_space<vmem>>, %arg3: memref<256x256xf32, #tpu.memory_space<vmem>>, %arg4: memref<8x256xf32, #tpu.memory_space<vmem>>) attributes {dimension_semantics = [#tpu.dimension_semantics<parallel>, #tpu.dimension_semantics<parallel>], iteration_bounds = array<i64: 1, 1>, scalar_prefetch = 0 : i64, scratch_operands = 0 : i64, tpu.core_type = #tpu.core_type<tc>, window_params = [{transform_indices = @transform_0, window_bounds = array<i64: 8, 256>}, {transform_indices = @transform_1, window_bounds = array<i64: 256, 256>}, {transform_indices = @transform_2, window_bounds = array<i64: 8, 256>}]} {
    %c0 = arith.constant 0 : index
    %c0_0 = arith.constant 0 : index
    %0 = vector.load %arg2[%c0, %c0_0] : memref<8x256xf32, #tpu.memory_space<vmem>>, vector<8x256xf32>
    %c0_1 = arith.constant 0 : index
    %c0_2 = arith.constant 0 : index
    %1 = vector.load %arg3[%c0_1, %c0_2] : memref<256x256xf32, #tpu.memory_space<vmem>>, vector<256x256xf32>
    %cst = arith.constant dense<0.000000e+00> : vector<8x256xf32>
    %2 = tpu.matmul %0, %1, %cst {dimension_numbers = #tpu.dot_dimension_numbers<[1], [1], [0], [0], [0, 0, 1, 0], [], []>} : vector<8x256xf32>, vector<256x256xf32>, vector<8x256xf32> -> vector<8x256xf32>
    %c0_3 = arith.constant 0 : index
    %c0_4 = arith.constant 0 : index
    %3 = vector.load %arg4[%c0_3, %c0_4] : memref<8x256xf32, #tpu.memory_space<vmem>>, vector<8x256xf32>
    tpu.vector_store %arg4[%c0_3, %c0_4], %2 {strides = array<i32>} : memref<8x256xf32, #tpu.memory_space<vmem>>, vector<8x256xf32>,
    return
  }
  func.func @transform_0(%arg0: i32, %arg1: i32) -> (i32, i32) {
    %c0_i32 = arith.constant 0 : i32
    %c0_i32_0 = arith.constant 0 : i32
    return %arg0, %c0_i32 : i32, i32
  }
  func.func @transform_1(%arg0: i32, %arg1: i32) -> (i32, i32) {
    %c0_i32 = arith.constant 0 : i32
    %c0_i32_0 = arith.constant 0 : i32
    return %arg1, %c0_i32 : i32, i32
  }
  func.func @transform_2(%arg0: i32, %arg1: i32) -> (i32, i32) {
    %c0_i32 = arith.constant 0 : i32
    return %arg0, %arg1 : i32, i32
  }
}

</mosaic_0001>

<llo_original>
// kernel: tpu_custom_call.1
$region0: #{tpu_custom_call.1}
  #allocation0 [shape = 'u32[]', space=smem, size = 0x4, offset = 0x4, fixed_abs, tag = 'smem constant byte address 0x4 - core index']
  #allocation1 [shape = 'u32[72,128]{1,0:T(1,128)}', space=vmem, size = 0x9000, scoped, tag = 'internal scratch']
  %s0 = inlined_call_operand.hbm [shape: f32[8,256], index: 0, kind: input, shape index: {}]
  %s1 = inlined_call_operand.hbm [shape: f32[256,256], index: 1, kind: input, shape index: {}]
  %s2 = inlined_call_operand.hbm [shape: f32[8,256], index: 2, kind: output, shape index: {}]
  %s3 = sld [smem:[#allocation0]]
  $region26: #{tpu_custom_call.1} parent=0
    _
  %s5 = ssub.s32 1, %s3
  %s6 = scalar_select 0, %s5, %s3
  $region1: #{tpu_custom_call.1} parent=0
    #allocation2 [shape = 'u8[8192]{0}', space=vmem, size = 0x2000, scoped, tag = 'input window, operand 0, single buffered']
    #allocation3 [shape = 's32[1]{0}', space=sflag, size = 0x4, scoped, tag = 'scoped memory for tpu_custom_call.1']
    #allocation4 [shape = 's32[1]{0}', space=sflag, size = 0x4, scoped, tag = 'scoped memory for tpu_custom_call.1']
    #allocation5 [shape = 'u8[262144]{0}', space=vmem, size = 0x40000, scoped, tag = 'input window, operand 1, single buffered']
    #allocation6 [shape = 's32[1]{0}', space=sflag, size = 0x4, scoped, tag = 'scoped memory for tpu_custom_call.1']
    #allocation7 [shape = 'u8[8192]{0}', space=vmem, size = 0x2000, scoped, tag = 'output window, operand 0, single buffered']
    %7 = vsyncpa [#allocation3], 0
    %8 = vsyncpa [#allocation6], 0
    %9 = vsyncpa [#allocation4], 0
    // Predicated region
    $region2: #{tpu_custom_call.1} parent=1 // pred_check
      _
    $region3: #{tpu_custom_call.1} parent=1 // pred_check_branch
      %11 = sbr.rel (0) target = $region5
    $region4: #{tpu_custom_call.1} parent=1 // pred_region
      %13 = vsyncadd [#allocation3], 0
      %s15 = sshll.u32 %s0, 4
      %s16 = int_to_ptr.hbm [resolvable:$true] %s15
      %s17 = sshll.u32 [#allocation2], 4
      %s18 = int_to_ptr.vmem [resolvable:$true] %s17
      %20 = dma.hbm_to_vmem [thread:$0]  %s16, 256, %s18, [#allocation3]
    $region5: #{tpu_custom_call.1} parent=1 // pred_fallthru
      _
    // Predicated region
    $region6: #{tpu_custom_call.1} parent=1 // pred_check
      _
    $region7: #{tpu_custom_call.1} parent=1 // pred_check_branch
      %22 = sbr.rel (0) target = $region9
    $region8: #{tpu_custom_call.1} parent=1 // pred_region
      %24 = vsyncadd [#allocation6], 0
      %s25 = sshll.u32 %s1, 4
      %s26 = int_to_ptr.hbm [resolvable:$true] %s25
      %s27 = sshll.u32 [#allocation5], 4
      %s28 = int_to_ptr.vmem [resolvable:$true] %s27
      %33 = dma.hbm_to_vmem [thread:$0]  %s26, 8192, %s28, [#allocation6], 256, 256, 16
    $region9: #{tpu_custom_call.1} parent=1 // pred_fallthru
      _
    // Predicated region
    $region10: #{tpu_custom_call.1} parent=1 // pred_check
      _
    $region11: #{tpu_custom_call.1} parent=1 // pred_check_branch
      %35 = sbr.rel (0) target = $region13
    $region12: #{tpu_custom_call.1} parent=1 // pred_region
      %37 = dma.done [#allocation3], 256
    $region13: #{tpu_custom_call.1} parent=1 // pred_fallthru
      _
    // Predicated region
    $region14: #{tpu_custom_call.1} parent=1 // pred_check
      _
    $region15: #{tpu_custom_call.1} parent=1 // pred_check_branch
      %39 = sbr.rel (0) target = $region17
    $region16: #{tpu_custom_call.1} parent=1 // pred_region
      %41 = dma.done [#allocation6], 8192
    $region17: #{tpu_custom_call.1} parent=1 // pred_fallthru
      _
    %v42 = vld [vmem:[#allocation2] sm:$0xff]
    %v43 = vld [vmem:[#allocation2 + $0x8] sm:$0xff]
    %v44 = vld [vmem:[#allocation5] sm:$0xff]
    %v45 = vld [vmem:[#allocation5 + $0x8] sm:$0xff]
    %v46 = vld [vmem:[#allocation5 + $0x10] sm:$0xff]
    %v47 = vld [vmem:[#allocation5 + $0x18] sm:$0xff]
    %v48 = vld [vmem:[#allocation5 + $0x20] sm:$0xff]
    %v49 = vld [vmem:[#allocation5 + $0x28] sm:$0xff]
    %v50 = vld [vmem:[#allocation5 + $0x30] sm:$0xff]
    %v51 = vld [vmem:[#allocation5 + $0x38] sm:$0xff]
    %v52 = vld [vmem:[#allocation5 + $0x40] sm:$0xff]
    %v53 = vld [vmem:[#allocation5 + $0x48] sm:$0xff]
    %v54 = vld [vmem:[#allocation5 + $0x50] sm:$0xff]
    %v55 = vld [vmem:[#allocation5 + $0x58] sm:$0xff]
    %v56 = vld [vmem:[#allocation5 + $0x60] sm:$0xff]
    %v57 = vld [vmem:[#allocation5 + $0x68] sm:$0xff]
    %v58 = vld [vmem:[#allocation5 + $0x70] sm:$0xff]
    %v59 = vld [vmem:[#allocation5 + $0x78] sm:$0xff]
    %v60 = vld [vmem:[#allocation5 + $0x80] sm:$0xff]
    %v61 = vld [vmem:[#allocation5 + $0x88] sm:$0xff]
    %v62 = vld [vmem:[#allocation5 + $0x90] sm:$0xff]
    %v63 = vld [vmem:[#allocation5 + $0x98] sm:$0xff]
    %v64 = vld [vmem:[#allocation5 + $0xa0] sm:$0xff]
    %v65 = vld [vmem:[#allocation5 + $0xa8] sm:$0xff]
    %v66 = vld [vmem:[#allocation5 + $0xb0] sm:$0xff]
    %v67 = vld [vmem:[#allocation5 + $0xb8] sm:$0xff]
    %v68 = vld [vmem:[#allocation5 + $0xc0] sm:$0xff]
    %v69 = vld [vmem:[#allocation5 + $0xc8] sm:$0xff]
    %v70 = vld [vmem:[#allocation5 + $0xd0] sm:$0xff]
    %v71 = vld [vmem:[#allocation5 + $0xd8] sm:$0xff]
    %v72 = vld [vmem:[#allocation5 + $0xe0] sm:$0xff]
    %v73 = vld [vmem:[#allocation5 + $0xe8] sm:$0xff]
    %v74 = vld [vmem:[#allocation5 + $0xf0] sm:$0xff]
    %v75 = vld [vmem:[#allocation5 + $0xf8] sm:$0xff]
    %v76 = vld [vmem:[#allocation5 + $0x100] sm:$0xff]
    %v77 = vld [vmem:[#allocation5 + $0x108] sm:$0xff]
    %v78 = vld [vmem:[#allocation5 + $0x110] sm:$0xff]
    %v79 = vld [vmem:[#allocation5 + $0x118] sm:$0xff]
    %v80 = vld [vmem:[#allocation5 + $0x120] sm:$0xff]
    %v81 = vld [vmem:[#allocation5 + $0x128] sm:$0xff]
    %v82 = vld [vmem:[#allocation5 + $0x130] sm:$0xff]
    %v83 = vld [vmem:[#allocation5 + $0x138] sm:$0xff]
    %v84 = vld [vmem:[#allocation5 + $0x140] sm:$0xff]
    %v85 = vld [vmem:[#allocation5 + $0x148] sm:$0xff]
    %v86 = vld [vmem:[#allocation5 + $0x150] sm:$0xff]
    %v87 = vld [vmem:[#allocation5 + $0x158] sm:$0xff]
    %v88 = vld [vmem:[#allocation5 + $0x160] sm:$0xff]
    %v89 = vld [vmem:[#allocation5 + $0x168] sm:$0xff]
    %v90 = vld [vmem:[#allocation5 + $0x170] sm:$0xff]
    %v91 = vld [vmem:[#allocation5 + $0x178] sm:$0xff]
    %v92 = vld [vmem:[#allocation5 + $0x180] sm:$0xff]
    %v93 = vld [vmem:[#allocation5 + $0x188] sm:$0xff]
    %v94 = vld [vmem:[#allocation5 + $0x190] sm:$0xff]
    %v95 = vld [vmem:[#allocation5 + $0x198] sm:$0xff]
    %v96 = vld [vmem:[#allocation5 + $0x1a0] sm:$0xff]
    %v97 = vld [vmem:[#allocation5 + $0x1a8] sm:$0xff]
    %v98 = vld [vmem:[#allocation5 + $0x1b0] sm:$0xff]
    %v99 = vld [vmem:[#allocation5 + $0x1b8] sm:$0xff]
    %v100 = vld [vmem:[#allocation5 + $0x1c0] sm:$0xff]
    %v101 = vld [vmem:[#allocation5 + $0x1c8] sm:$0xff]
    %v102 = vld [vmem:[#allocation5 + $0x1d0] sm:$0xff]
    %v103 = vld [vmem:[#allocation5 + $0x1d8] sm:$0xff]
    %v104 = vld [vmem:[#allocation5 + $0x1e0] sm:$0xff]
    %v105 = vld [vmem:[#allocation5 + $0x1e8] sm:$0xff]
    %v106 = vld [vmem:[#allocation5 + $0x1f0] sm:$0xff]
    %v107 = vld [vmem:[#allocation5 + $0x1f8] sm:$0xff]
    %108 = vmatpush.xpose.msra.mxu0 %v74
    %109 = vmatpush.xpose.msra.mxu0 %v72
    %110 = vmatpush.xpose.msra.mxu0 %v70
    %111 = vmatpush.xpose.msra.mxu0 %v68
    %112 = vmatpush.xpose.msra.mxu0 %v66
    %113 = vmatpush.xpose.msra.mxu0 %v64
    %114 = vmatpush.xpose.msra.mxu0 %v62
    %115 = vmatpush.xpose.msra.mxu0 %v60
    %116 = vmatpush.xpose.msra.mxu0 %v58
    %117 = vmatpush.xpose.msra.mxu0 %v56
    %118 = vmatpush.xpose.msra.mxu0 %v54
    %119 = vmatpush.xpose.msra.mxu0 %v52
    %120 = vmatpush.xpose.msra.mxu0 %v50
    %121 = vmatpush.xpose.msra.mxu0 %v48
    %122 = vmatpush.xpose.msra.mxu0 %v46
    %123 = vmatpush.xpose.msra.mxu0 %v44
    %124 = vmatmul.f32.gmra.mxu0 %v42
    %v125 = vpop.f32.mrf.mxu0
    %v126 = vadd.f32 0.0, %v125
    %127 = vdwg.mxu0
    %128 = vmatpush.xpose.msra.mxu0 %v75
    %129 = vmatpush.xpose.msra.mxu0 %v73
    %130 = vmatpush.xpose.msra.mxu0 %v71
    %131 = vmatpush.xpose.msra.mxu0 %v69
    %132 = vmatpush.xpose.msra.mxu0 %v67
    %133 = vmatpush.xpose.msra.mxu0 %v65
    %134 = vmatpush.xpose.msra.mxu0 %v63
    %135 = vmatpush.xpose.msra.mxu0 %v61
    %136 = vmatpush.xpose.msra.mxu0 %v59
    %137 = vmatpush.xpose.msra.mxu0 %v57
    %138 = vmatpush.xpose.msra.mxu0 %v55
    %139 = vmatpush.xpose.msra.mxu0 %v53
    %140 = vmatpush.xpose.msra.mxu0 %v51
    %141 = vmatpush.xpose.msra.mxu0 %v49
    %142 = vmatpush.xpose.msra.mxu0 %v47
    %143 = vmatpush.xpose.msra.mxu0 %v45
    %144 = vmatmul.f32.gmra.mxu0 %v43
    %v145 = vpop.f32.mrf.mxu0
    %v146 = vadd.f32 %v126, %v145
    %147 = vdwg.mxu0
    %148 = vmatpush.xpose.msra.mxu0 %v106
    %149 = vmatpush.xpose.msra.mxu0 %v104
    %150 = vmatpush.xpose.msra.mxu0 %v102
    %151 = vmatpush.xpose.msra.mxu0 %v100
    %152 = vmatpush.xpose.msra.mxu0 %v98
    %153 = vmatpush.xpose.msra.mxu0 %v96
    %154 = vmatpush.xpose.msra.mxu0 %v94
    %155 = vmatpush.xpose.msra.mxu0 %v92
    %156 = vmatpush.xpose.msra.mxu0 %v90
    %157 = vmatpush.xpose.msra.mxu0 %v88
    %158 = vmatpush.xpose.msra.mxu0 %v86
    %159 = vmatpush.xpose.msra.mxu0 %v84
    %160 = vmatpush.xpose.msra.mxu0 %v82
    %161 = vmatpush.xpose.msra.mxu0 %v80
    %162 = vmatpush.xpose.msra.mxu0 %v78
    %163 = vmatpush.xpose.msra.mxu0 %v76
    %164 = vmatmul.f32.gmra.mxu0 %v42
    %v165 = vpop.f32.mrf.mxu0
    %v166 = vadd.f32 0.0, %v165
    %167 = vdwg.mxu0
    %168 = vmatpush.xpose.msra.mxu0 %v107
    %169 = vmatpush.xpose.msra.mxu0 %v105
    %170 = vmatpush.xpose.msra.mxu0 %v103
    %171 = vmatpush.xpose.msra.mxu0 %v101
    %172 = vmatpush.xpose.msra.mxu0 %v99
    %173 = vmatpush.xpose.msra.mxu0 %v97
    %174 = vmatpush.xpose.msra.mxu0 %v95
    %175 = vmatpush.xpose.msra.mxu0 %v93
    %176 = vmatpush.xpose.msra.mxu0 %v91
    %177 = vmatpush.xpose.msra.mxu0 %v89
    %178 = vmatpush.xpose.msra.mxu0 %v87
    %179 = vmatpush.xpose.msra.mxu0 %v85
    %180 = vmatpush.xpose.msra.mxu0 %v83
    %181 = vmatpush.xpose.msra.mxu0 %v81
    %182 = vmatpush.xpose.msra.mxu0 %v79
    %183 = vmatpush.xpose.msra.mxu0 %v77
    %184 = vmatmul.f32.gmra.mxu0 %v43
    %v185 = vpop.f32.mrf.mxu0
    %v186 = vadd.f32 %v166, %v185
    %187 = vdwg.mxu0
    %188 = vst [vmem:[#allocation7] sm:$0xff] %v146
    %189 = vst [vmem:[#allocation7 + $0x8] sm:$0xff] %v186
    // Predicated region
    $region18: #{tpu_custom_call.1} parent=1 // pred_check
      _
    $region19: #{tpu_custom_call.1} parent=1 // pred_check_branch
      %191 = sbr.rel (0) target = $region21
    $region20: #{tpu_custom_call.1} parent=1 // pred_region
      %193 = vsyncadd [#allocation4], 0
      %s195 = sshll.u32 [#allocation7], 4
      %s196 = int_to_ptr.vmem [resolvable:$true] %s195
      %s197 = sshll.u32 %s2, 4
      %s198 = int_to_ptr.hbm [resolvable:$true] %s197
      %200 = dma.vmem_to_hbm [thread:$0]  %s196, 256, %s198, [#allocation4]
    $region21: #{tpu_custom_call.1} parent=1 // pred_fallthru
      _
    // Predicated region
    $region22: #{tpu_custom_call.1} parent=1 // pred_check
      _
    $region23: #{tpu_custom_call.1} parent=1 // pred_check_branch
      %202 = sbr.rel (0) target = $region25
    $region24: #{tpu_custom_call.1} parent=1 // pred_region
      %204 = dma.done [#allocation4], 256
    $region25: #{tpu_custom_call.1} parent=1 // pred_fallthru
      _
    %205 = vsyncpa [#allocation3], 1
    %206 = vsyncpa [#allocation6], 1
    %207 = vsyncpa [#allocation4], 1

</llo_original>
